<compile_context>
chip_gen: v7x
topology: tpu7x:2x2x1
jax: 0.10.0
libtpu: 0.0.40
codegen_flags: <defaults>
</compile_context>

<pallas_src>
import jax
import jax.numpy as jnp
from jax.experimental import pallas as pl
from jax.experimental.pallas import tpu as pltpu


def _round_up(x, m):
    return (x + m - 1) // m * m


def _choose_tm(M, tm_max, min_steps):
    # Biggest row tile (multiple of 8) that still leaves ~min_steps grid steps,
    # capped at tm_max; never below 8.
    tm = _round_up(pl.cdiv(M, min_steps), 8)
    return max(8, min(tm_max, tm))


def patch_embed_kernel(x_ref, w_ref, b_ref, o_ref):
    # x_ref: (tm, K) bf16 patch rows; w_ref: (K, E) bf16 resident weight;
    # b_ref: (1, E) f32 bias; o_ref: (tm, E) bf16 output tile.
    acc = jnp.dot(x_ref[...], w_ref[...], preferred_element_type=jnp.float32)
    o_ref[...] = (acc + b_ref[...]).astype(o_ref.dtype)


def patch_embed_forward(x, w, b, patch_size=(4, 4), *, tm_max=4096, min_steps=8,
                        out_dtype=jnp.bfloat16):
    """x: (B, C, H, W) f32/bf16.  w: (C*Ph*Pw, E) GEMM layout of the conv weight
    (k = c*Ph*Pw + ph*Pw + pw).  b: (E,).  Returns (out (B, Wh*Ww, E), Wh, Ww)."""
    B, C, H, W = x.shape
    Ph, Pw = patch_size
    K, E = w.shape
    assert K == C * Ph * Pw

    # Cast to bf16 first so the pad + im2col transpose move half the bytes, then pad
    # H/W to multiples of the patch size (zeros, right/bottom) — matches F.pad.
    x = x.astype(jnp.bfloat16)
    pad_h = (-H) % Ph
    pad_w = (-W) % Pw
    if pad_h or pad_w:
        x = jnp.pad(x, ((0, 0), (0, 0), (0, pad_h), (0, pad_w)))
    Hp, Wp = H + pad_h, W + pad_w
    Wh, Ww = Hp // Ph, Wp // Pw
    M = B * Wh * Ww

    # Patchify (im2col for stride == kernel): (B*Wh*Ww, C*Ph*Pw), row m = (b, wh, ww).
    patches = x.reshape(B, C, Wh, Ph, Ww, Pw)
    patches = patches.transpose(0, 2, 4, 1, 3, 5).reshape(M, K)

    w_bf16 = w.astype(jnp.bfloat16)                     # (K, E) resident weight
    b_f32 = b.astype(jnp.float32).reshape(1, E)         # f32 bias for f32 epilogue

    tm = _choose_tm(M, tm_max, min_steps)
    grid = (pl.cdiv(M, tm),)                            # ragged tail is masked by Pallas

    # VMEM budget: double-buffered x/out tiles + resident weight + bias (+ headroom),
    # capped generation-aware so v7x (64 MiB/TC) keeps room for neighboring ops.
    vmem_need = (2 * tm * K * 2          # x tiles (bf16)
                 + 2 * K * E * 2         # weight (bf16), conservatively x2
                 + 2 * E * 4             # bias (f32)
                 + 2 * tm * E * 2)       # out tiles (bf16)
    try:
        vmem_cap = int(pltpu.get_tpu_info().vmem_capacity_bytes)
    except Exception:
        vmem_cap = 64 << 20
    vmem_limit = min(max(2 * int(vmem_need) + (1 << 20), 4 << 20), (vmem_cap * 3) // 4)

    cost = pl.CostEstimate(
        flops=2 * M * K * E,
        transcendentals=0,
        bytes_accessed=(M * K * 2 + K * E * 2 + E * 4 + M * E * 2),
    )

    out2d = pl.pallas_call(
        patch_embed_kernel,
        out_shape=jax.ShapeDtypeStruct((M, E), out_dtype),
        grid_spec=pltpu.PrefetchScalarGridSpec(
            num_scalar_prefetch=0,
            grid=grid,
            in_specs=[
                pl.BlockSpec((tm, K), lambda i: (i, 0)),   # patch rows tile (K = full dim)
                pl.BlockSpec((K, E), lambda i: (0, 0)),    # weight, resident across grid
                pl.BlockSpec((1, E), lambda i: (0, 0)),    # bias, resident
            ],
            out_specs=pl.BlockSpec((tm, E), lambda i: (i, 0)),
        ),
        compiler_params=pltpu.CompilerParams(
            dimension_semantics=("parallel",),
            vmem_limit_bytes=vmem_limit,
        ),
        cost_estimate=cost,
    )(patches, w_bf16, b_f32)

    out = out2d.reshape(B, Wh * Ww, E)   # pure metadata reshape, no copy / no slice
    # TODO(synk): optional norm_layer (LayerNorm over embed_dim) is None in the default
    # config; if enabled it should be fused into the kernel epilogue.
    return out, Wh, Ww


def init_params(key, in_chans, patch_size, embed_dim, dtype=jnp.float32):
    Ph, Pw = patch_size
    K = in_chans * Ph * Pw
    kw, kb = jax.random.split(key)
    w = jax.random.normal(kw, (K, embed_dim), dtype) * 0.02   # GEMM layout (K, E)
    b = jax.random.normal(kb, (embed_dim,), dtype) * 0.02
    return w, b


if __name__ == "__main__":
    # Small shapes consistent with PatchEmbed: patch 4x4, 3 channels, embed_dim=96.
    # W=18 is not divisible by 4 so the right-pad branch is exercised (pads to 20).
    B, C, H, W = 2, 3, 16, 18
    patch_size = (4, 4)
    embed_dim = 96

    key = jax.random.PRNGKey(0)
    kx, kp = jax.random.split(key)
    x = jax.random.normal(kx, (B, C, H, W), jnp.float32)
    w, b = init_params(kp, C, patch_size, embed_dim)

    out, Wh, Ww = patch_embed_forward(x, w, b, patch_size)
    jax.block_until_ready(out)

    # Pure-JAX reference: the exact Conv2d(kernel=stride=patch) + flatten + transpose.
    Ph, Pw = patch_size
    pad_h = (-H) % Ph
    pad_w = (-W) % Pw
    xp = jnp.pad(x, ((0, 0), (0, 0), (0, pad_h), (0, pad_w)))
    w_conv = w.T.reshape(embed_dim, C, Ph, Pw)          # (O, I, kH, kW)
    ref = jax.lax.conv_general_dilated(
        xp, w_conv, window_strides=(Ph, Pw), padding="VALID",
        dimension_numbers=("NCHW", "OIHW", "NCHW"))
    ref = ref + b[None, :, None, None]
    ref = ref.reshape(B, embed_dim, Wh * Ww).transpose(0, 2, 1)

    assert (Wh, Ww) == ((H + pad_h) // Ph, (W + pad_w) // Pw)
    assert out.shape == (B, Wh * Ww, embed_dim)
    # bf16 operands / bf16 output with f32 accumulation -> loosened tolerance vs f32 ref.
    assert jnp.allclose(out.astype(jnp.float32), ref, atol=1e-2, rtol=1e-2), \
        "mismatch vs reference"

    print("KERNEL_OK")
</pallas_src>

<mosaic_0001>
module attributes {stable_mosaic.version = 11 : i64} {
  func.func @patch_embed_kernel(%arg0: i32, %arg1: memref<8x48xbf16, #tpu.memory_space<vmem>>, %arg2: memref<48x96xbf16, #tpu.memory_space<vmem>>, %arg3: memref<1x96xf32, #tpu.memory_space<vmem>>, %arg4: memref<8x96xbf16, #tpu.memory_space<vmem>>) attributes {dimension_semantics = [#tpu.dimension_semantics<parallel>], iteration_bounds = array<i64: 5>, scalar_prefetch = 0 : i64, scratch_operands = 0 : i64, tpu.core_type = #tpu.core_type<tc>, window_params = [{transform_indices = @transform_0, window_bounds = array<i64: 8, 48>}, {pipeline_mode = #tpu.pipeline_mode<synchronous>, transform_indices = @transform_1, window_bounds = array<i64: 48, 96>}, {pipeline_mode = #tpu.pipeline_mode<synchronous>, transform_indices = @transform_2, window_bounds = array<i64: 1, 96>}, {transform_indices = @transform_3, window_bounds = array<i64: 8, 96>}]} {
    %c0 = arith.constant 0 : index
    %c0_0 = arith.constant 0 : index
    %0 = vector.load %arg1[%c0, %c0_0] : memref<8x48xbf16, #tpu.memory_space<vmem>>, vector<8x48xbf16>
    %c0_1 = arith.constant 0 : index
    %c0_2 = arith.constant 0 : index
    %1 = vector.load %arg2[%c0_1, %c0_2] : memref<48x96xbf16, #tpu.memory_space<vmem>>, vector<48x96xbf16>
    %cst = arith.constant dense<0.000000e+00> : vector<8x96xf32>
    %2 = tpu.matmul %0, %1, %cst {dimension_numbers = #tpu.dot_dimension_numbers<[1], [0], [0], [1], [0, 0, 1, 1], [], []>} : vector<8x48xbf16>, vector<48x96xbf16>, vector<8x96xf32> -> vector<8x96xf32>
    %c0_3 = arith.constant 0 : index
    %c0_4 = arith.constant 0 : index
    %3 = vector.load %arg3[%c0_3, %c0_4] : memref<1x96xf32, #tpu.memory_space<vmem>>, vector<1x96xf32>
    %4 = vector.broadcast %3 : vector<1x96xf32> to vector<8x96xf32>
    %5 = arith.addf %2, %4 : vector<8x96xf32>
    %6 = arith.truncf %5 : vector<8x96xf32> to vector<8x96xbf16>
    %c0_5 = arith.constant 0 : index
    %c0_6 = arith.constant 0 : index
    %7 = vector.load %arg4[%c0_5, %c0_6] : memref<8x96xbf16, #tpu.memory_space<vmem>>, vector<8x96xbf16>
    tpu.vector_store %arg4[%c0_5, %c0_6], %6 {strides = array<i32>} : memref<8x96xbf16, #tpu.memory_space<vmem>>, vector<8x96xbf16>,
    return
  }
  func.func @transform_0(%arg0: i32) -> (i32, i32) {
    %c0_i32 = arith.constant 0 : i32
    %c0_i32_0 = arith.constant 0 : i32
    return %arg0, %c0_i32 : i32, i32
  }
  func.func @transform_1(%arg0: i32) -> (i32, i32) {
    %c0_i32 = arith.constant 0 : i32
    %c0_i32_0 = arith.constant 0 : i32
    %c0_i32_1 = arith.constant 0 : i32
    return %c0_i32, %c0_i32_0 : i32, i32
  }
  func.func @transform_2(%arg0: i32) -> (i32, i32) {
    %c0_i32 = arith.constant 0 : i32
    %c0_i32_0 = arith.constant 0 : i32
    %c0_i32_1 = arith.constant 0 : i32
    return %c0_i32, %c0_i32_0 : i32, i32
  }
  func.func @transform_3(%arg0: i32) -> (i32, i32) {
    %c0_i32 = arith.constant 0 : i32
    %c0_i32_0 = arith.constant 0 : i32
    return %arg0, %c0_i32 : i32, i32
  }
}

</mosaic_0001>

<llo_original>
// kernel: tpu_custom_call.1
$region0: #{tpu_custom_call.1}
  #allocation0 [shape = 'u32[]', space=smem, size = 0x4, offset = 0x4, fixed_abs, tag = 'smem constant byte address 0x4 - core index']
  #allocation1 [shape = 'u32[144,128]{1,0:T(1,128)}', space=vmem, size = 0x12000, scoped, tag = 'internal scratch']
  %s0 = inlined_call_operand.hbm [shape: bf16[40,48], index: 0, kind: input, shape index: {}]
  %s1 = inlined_call_operand.hbm [shape: bf16[48,96], index: 1, kind: input, shape index: {}]
  %s2 = inlined_call_operand.vmem [shape: f32[1,96], index: 2, kind: input, shape index: {}]
  %s3 = inlined_call_operand.hbm [shape: bf16[40,96], index: 3, kind: output, shape index: {}]
  %s4 = sld [smem:[#allocation0]]
  $region53: #{tpu_custom_call.1} parent=0
    _
  %s6 = ssub.s32 1, %s4
  %s7 = scalar_select 0, %s6, %s4
  $region1: #{tpu_custom_call.1} parent=0
    #allocation2 [shape = 'u8[4096]{0}', space=vmem, size = 0x1000, scoped, tag = 'input window, operand 0']
    #allocation3 [shape = 's32[2]{0}', space=sflag, size = 0x8, scoped, tag = 'scoped memory for tpu_custom_call.1']
    #allocation4 [shape = 's32[2]{0}', space=sflag, size = 0x8, scoped, tag = 'scoped memory for tpu_custom_call.1']
    #allocation5 [shape = 'u8[12288]{0}', space=vmem, size = 0x3000, scoped, tag = 'input window, operand 1, single buffered']
    #allocation6 [shape = 's32[1]{0}', space=sflag, size = 0x4, scoped, tag = 'scoped memory for tpu_custom_call.1']
    #allocation7 [shape = 'u8[4096]{0}', space=vmem, size = 0x1000, scoped, tag = 'output window, operand 0']
    %8 = vsyncpa [#allocation3], 0
    %s9 = scalar_lea.sflag [#allocation3], 1
    %10 = vsyncpa %s9, 0
    %11 = vsyncpa [#allocation6], 0
    %12 = vsyncpa [#allocation4], 0
    %s13 = scalar_lea.sflag [#allocation4], 1
    %14 = vsyncpa %s13, 0
    loop: start=0, step=1, limit=7
    $region2: #{tpu_custom_call.1} parent=1 // loop_pre_header
      _
    $region3: #{tpu_custom_call.1} parent=1 // loop_header
      %s16 = sphi 0, %s20
      %p17 = scmp.ge.s32.totalorder %s16, 7
      %s26 = sphi 0, %s28
      %s29 = sphi 0, %s26
      %s30 = sphi 0, %s29
      %s46 = sphi 0, %s30
      %s50 = sphi 0, %s50
      %s52 = sphi 0, %s50
      %s53 = sphi 0, %s52
      %s67 = sphi 0, %s53
      %s71 = sphi 0, %s71
      %s73 = sphi 0, %s71
      %s74 = sphi 0, %s73
      %s88 = sphi 0, %s74
      %s94 = sphi 0, %s96
      %s97 = sphi 0, %s94
      %s98 = sphi 0, %s97
      %s114 = sphi 0, %s98
    $region4: #{tpu_custom_call.1} parent=1 // loop_header_branch
      %19 = sbr.rel (%p17) target = $region8
    $region5: #{tpu_custom_call.1} parent=1 // loop_body
      %s21 = ssub.s32 %s16, 1
      %s22 = ssub.s32 %s16, 2
      %s23 = sadd.s32 %s16, 1
      %s24 = ssub.s32 %s16, %s23
      %p25 = scmp.eq.s32.totalorder %s24, 0
      %s27 = sadd.s32 %s26, 1
      %s28 = scalar_select %p25, %s26, %s27
      %p31 = pneg %p25
      %p32 = scmp.eq.s32.totalorder %s16, 4
      %p33 = por %p31, %p32
      %p34 = scmp.ne.s32.totalorder %s26, %s29
      %p35 = scmp.eq.s32.totalorder %s16, 0
      %p36 = por %p34, %p35
      %p37 = scmp.ne.s32.totalorder %s26, %s29
      %p38 = scmp.eq.s32.totalorder %s21, 4
      %p39 = por %p37, %p38
      %p40 = scmp.ne.s32.totalorder %s29, %s30
      %p41 = scmp.eq.s32.totalorder %s21, 0
      %p42 = por %p40, %p41
      %p43 = scmp.ne.s32.totalorder %s29, %s30
      %p44 = scmp.eq.s32.totalorder %s22, 4
      %p45 = por %p43, %p44
      %p47 = scmp.ne.s32.totalorder %s30, %s46
      %p48 = scmp.eq.s32.totalorder %s22, 0
      %p49 = por %p47, %p48
      %s51 = sadd.s32 %s50, 1
      %p54 = scmp.eq.s32.totalorder %s16, 4
      %p55 = scmp.ne.s32.totalorder %s50, %s52
      %p56 = scmp.eq.s32.totalorder %s16, 0
      %p57 = por %p55, %p56
      %p58 = scmp.ne.s32.totalorder %s50, %s52
      %p59 = scmp.eq.s32.totalorder %s21, 4
      %p60 = por %p58, %p59
      %p61 = scmp.ne.s32.totalorder %s52, %s53
      %p62 = scmp.eq.s32.totalorder %s21, 0
      %p63 = por %p61, %p62
      %p64 = scmp.ne.s32.totalorder %s52, %s53
      %p65 = scmp.eq.s32.totalorder %s22, 4
      %p66 = por %p64, %p65
      %p68 = scmp.ne.s32.totalorder %s53, %s67
      %p69 = scmp.eq.s32.totalorder %s22, 0
      %p70 = por %p68, %p69
      %s72 = sadd.s32 %s71, 1
      %p75 = scmp.eq.s32.totalorder %s16, 4
      %p76 = scmp.ne.s32.totalorder %s71, %s73
      %p77 = scmp.eq.s32.totalorder %s16, 0
      %p78 = por %p76, %p77
      %p79 = scmp.ne.s32.totalorder %s71, %s73
      %p80 = scmp.eq.s32.totalorder %s21, 4
      %p81 = por %p79, %p80
      %p82 = scmp.ne.s32.totalorder %s73, %s74
      %p83 = scmp.eq.s32.totalorder %s21, 0
      %p84 = por %p82, %p83
      %p85 = scmp.ne.s32.totalorder %s73, %s74
      %p86 = scmp.eq.s32.totalorder %s22, 4
      %p87 = por %p85, %p86
      %p89 = scmp.ne.s32.totalorder %s74, %s88
      %p90 = scmp.eq.s32.totalorder %s22, 0
      %p91 = por %p89, %p90
      %s92 = ssub.s32 %s16, %s23
      %p93 = scmp.eq.s32.totalorder %s92, 0
      %s95 = sadd.s32 %s94, 1
      %s96 = scalar_select %p93, %s94, %s95
      %p99 = pneg %p93
      %p100 = scmp.eq.s32.totalorder %s16, 4
      %p101 = por %p99, %p100
      %p102 = scmp.ne.s32.totalorder %s94, %s97
      %p103 = scmp.eq.s32.totalorder %s16, 0
      %p104 = por %p102, %p103
      %p105 = scmp.ne.s32.totalorder %s94, %s97
      %p106 = scmp.eq.s32.totalorder %s21, 4
      %p107 = por %p105, %p106
      %p108 = scmp.ne.s32.totalorder %s97, %s98
      %p109 = scmp.eq.s32.totalorder %s21, 0
      %p110 = por %p108, %p109
      %p111 = scmp.ne.s32.totalorder %s97, %s98
      %p112 = scmp.eq.s32.totalorder %s22, 4
      %p113 = por %p111, %p112
      %p115 = scmp.ne.s32.totalorder %s98, %s114
      %p116 = scmp.eq.s32.totalorder %s22, 0
      %p117 = por %p115, %p116
      %p118 = scmp.le.s32.totalorder 1, %s16
      %p119 = scmp.lt.s32.totalorder %s16, 6
      %p120 = pnand %p118, %p119
      %p121 = pneg %p120
      // Predicated region
      $region9: #{tpu_custom_call.1} parent=5 // pred_check
        _
      $region10: #{tpu_custom_call.1} parent=5 // pred_check_branch
        %123 = sbr.rel (%p120) target = $region12
      $region11: #{tpu_custom_call.1} parent=5 // pred_region
        %s124 = ssub.s32 %s16, 1
        // Predicated region
        $region13: #{tpu_custom_call.1} parent=11 // pred_check
          %p125 = pneg %p63
        $region14: #{tpu_custom_call.1} parent=11 // pred_check_branch
          %127 = sbr.rel (%p125) target = $region16
        $region15: #{tpu_custom_call.1} parent=11 // pred_region
          %s129 = ssub.s32 384, 384
          %130 = vsyncadd [#allocation6], %s129
          %s131 = sshll.u32 [#allocation5], 4
          %s132 = int_to_ptr.vmem [resolvable:$true] %s131
          %137 = dma.hbm_to_vmem [thread:$0]  %s1, 384, %s132, [#allocation6], 64, 64, 4
        $region16: #{tpu_custom_call.1} parent=11 // pred_fallthru
          _
        // Predicated region
        $region17: #{tpu_custom_call.1} parent=11 // pred_check
          %p138 = pneg %p84
        $region18: #{tpu_custom_call.1} parent=11 // pred_check_branch
          %140 = sbr.rel (%p138) target = $region20
        $region19: #{tpu_custom_call.1} parent=11 // pred_region
          _
        $region20: #{tpu_custom_call.1} parent=11 // pred_fallthru
          _
      $region12: #{tpu_custom_call.1} parent=5 // pred_fallthru
        _
      %p141 = scmp.lt.s32.totalorder %s16, 5
      // Predicated region
      $region21: #{tpu_custom_call.1} parent=5 // pred_check
        %p142 = pneg %p141
      $region22: #{tpu_custom_call.1} parent=5 // pred_check_branch
        %144 = sbr.rel (%p142) target = $region24
      $region23: #{tpu_custom_call.1} parent=5 // pred_region
        // Predicated region
        $region25: #{tpu_custom_call.1} parent=23 // pred_check
          %p145 = pneg %p36
        $region26: #{tpu_custom_call.1} parent=23 // pred_check_branch
          %147 = sbr.rel (%p145) target = $region28
        $region27: #{tpu_custom_call.1} parent=23 // pred_region
          %s148 = sand.u32 %s26, 1
          %s149 = scalar_lea.sflag [#allocation3], %s148
          %s150 = sand.u32 %s26, 1
          %s151 = smul.addr %s150, 4
          %s152 = scalar_lea.vmem [#allocation2], %s151
          %s154 = ssub.s32 64, 64
          %155 = vsyncadd %s149, %s154
          %s156 = smul.addr %s16, 64
          %s157 = scalar_lea.hbm %s0, %s156
          %s159 = sshll.u32 %s152, 4
          %s160 = int_to_ptr.vmem [resolvable:$true] %s159
          %162 = dma.hbm_to_vmem [thread:$0]  %s157, 64, %s160, %s149
        $region28: #{tpu_custom_call.1} parent=23 // pred_fallthru
          _
      $region24: #{tpu_custom_call.1} parent=5 // pred_fallthru
        _
      %p163 = scmp.le.s32.totalorder 1, %s16
      %p164 = scmp.lt.s32.totalorder %s16, 6
      %p165 = pnand %p163, %p164
      %p166 = pneg %p165
      // Predicated region
      $region29: #{tpu_custom_call.1} parent=5 // pred_check
        _
      $region30: #{tpu_custom_call.1} parent=5 // pred_check_branch
        %168 = sbr.rel (%p165) target = $region32
      $region31: #{tpu_custom_call.1} parent=5 // pred_region
        %s169 = ssub.s32 %s16, 1
        %s170 = sand.u32 %s29, 1
        %s171 = scalar_lea.sflag [#allocation3], %s170
        %s172 = sand.u32 %s29, 1
        %s173 = smul.addr %s172, 4
        %s174 = scalar_lea.vmem [#allocation2], %s173
        // Predicated region
        $region33: #{tpu_custom_call.1} parent=31 // pred_check
          %p175 = pneg %p42
        $region34: #{tpu_custom_call.1} parent=31 // pred_check_branch
          %177 = sbr.rel (%p175) target = $region36
        $region35: #{tpu_custom_call.1} parent=31 // pred_region
          %178 = dma.done %s171, 64
        $region36: #{tpu_custom_call.1} parent=31 // pred_fallthru
          _
        // Predicated region
        $region37: #{tpu_custom_call.1} parent=31 // pred_check
          %p179 = pneg %p63
        $region38: #{tpu_custom_call.1} parent=31 // pred_check_branch
          %181 = sbr.rel (%p179) target = $region40
        $region39: #{tpu_custom_call.1} parent=31 // pred_region
          %182 = dma.done [#allocation6], 384
        $region40: #{tpu_custom_call.1} parent=31 // pred_fallthru
          _
        %s183 = sand.u32 %s29, 1
        %s184 = scalar_lea.sflag [#allocation3], %s183
        %s185 = sand.u32 %s29, 1
        %s186 = smul.addr %s185, 4
        %s187 = scalar_lea.vmem [#allocation2], %s186
        %p188 = pneg %p42
        %p189 = pneg %p39
        %p190 = pneg %p63
        %p191 = pneg %p60
        %p192 = pneg %p84
        %p193 = pneg %p81
        %p194 = pneg %p110
        %p195 = pneg %p107
        %s196 = sand.u32 %s97, 1
        %s197 = scalar_lea.sflag [#allocation4], %s196
        %s198 = sand.u32 %s97, 1
        %s199 = smul.addr %s198, 4
        %s200 = scalar_lea.vmem [#allocation7], %s199
        %v202 = vld [vmem:[%s174] sm:$0xf]
        %v203 = vld [vmem:[#allocation5] sm:$0xf]
        %v204 = vld [vmem:[#allocation5 + $0x4] sm:$0xf]
        %v205 = vld [vmem:[#allocation5 + $0x8] sm:$0xf]
        %v206 = vld [vmem:[#allocation5 + $0xc] sm:$0xf]
        %v207 = vld [vmem:[#allocation5 + $0x10] sm:$0xf]
        %v208 = vld [vmem:[#allocation5 + $0x14] sm:$0xf]
        %v209 = vld [vmem:[%s2] sm:$0x1]
        %v211 = vlaneseq
        %v212 = vshrl.u32 %v211, 7
        %v213 = vsub.s32 0, %v212
        %v214 = vrot.slane %v209, %v213
        %v222 = vunpack.c.l.b16 %v203
        %v223 = vunpack.c.l.b16 %v204
        %v224 = vunpack.c.l.b16 %v205
        %v225 = vunpack.c.l.b16 %v206
        %v226 = vunpack.c.l.b16 %v207
        %v227 = vunpack.c.l.b16 %v208
        %v228 = vpack.c.b16 %v223, %v222
        %v229 = vpack.c.b16 %v225, %v224
        %v230 = vpack.c.b16 %v227, %v226
        %vm234 = vcmask 392192
        %v236 = vsel %vm234, %v202, 0
        %238 = vmatprep.subr.bf16.mxu0 0
        %239 = vmatpush1.bf16.msra.mxu0 %v228
        %240 = vmatprep.subr.bf16.mxu0 0
        %241 = vmatpush1.bf16.msra.mxu0 %v229
        %242 = vmatprep.subr.bf16.mxu0 0
        %243 = vmatpush1.bf16.msra.mxu0 %v230
        %244 = vmatprep.subr.bf16.mxu0 0
        %245 = vmatpush1.bf16.msra.mxu0 0
        %246 = vmatprep.subr.bf16.mxu0 0
        %247 = vmatpush1.bf16.msra.mxu0 0
        %248 = vmatprep.subr.bf16.mxu0 0
        %249 = vmatpush1.bf16.msra.mxu0 0
        %250 = vmatprep.subr.bf16.mxu0 0
        %251 = vmatpush1.bf16.msra.mxu0 0
        %252 = vmatprep.subr.bf16.mxu0 0
        %253 = vmatpush1.bf16.msra.mxu0 0
        %254 = vmatprep.subr.bf16.mxu0 0
        %255 = vmatpush1.bf16.msra.mxu0 0
        %256 = vmatprep.subr.bf16.mxu0 0
        %257 = vmatpush1.bf16.msra.mxu0 0
        %258 = vmatprep.subr.bf16.mxu0 0
        %259 = vmatpush1.bf16.msra.mxu0 0
        %260 = vmatprep.subr.bf16.mxu0 0
        %261 = vmatpush1.bf16.msra.mxu0 0
        %262 = vmatprep.subr.bf16.mxu0 0
        %263 = vmatpush1.bf16.msra.mxu0 0
        %264 = vmatprep.subr.bf16.mxu0 0
        %265 = vmatpush1.bf16.msra.mxu0 0
        %266 = vmatprep.subr.bf16.mxu0 0
        %267 = vmatpush1.bf16.msra.mxu0 0
        %268 = vmatprep.subr.bf16.mxu0 0
        %269 = vmatpush1.bf16.msra.mxu0 0
        %270 = vmatprep.mubr.bf16.mxu0 0
        %271 = vmatmul.mubr.bf16.gmra.mrb[0].mxu0 %v236
        %v272 = vpop.f32.mrb[0].mxu0
        %v273 = vadd.f32 %v214, %v272
        %v274 = vpop.f32.mrb[0].mxu0
        %v275 = vpop.f32.mrb[0].mxu0
        %v276 = vpop.f32.mrb[0].mxu0
        %277 = vdwg.mxu0
        %v278 = vpack.c.bf16 %v273, %v273
        %vm279 = vcmask 781312
        %280 = vst.msk [vmem:[%s200] sm:$0xf] %vm279, %v278
        %s281 = sand.u32 %s97, 1
        %s282 = scalar_lea.sflag [#allocation4], %s281
        %s283 = sand.u32 %s97, 1
        %s284 = smul.addr %s283, 4
        %s285 = scalar_lea.vmem [#allocation7], %s284
        // Predicated region
        $region41: #{tpu_custom_call.1} parent=31 // pred_check
          %p286 = pneg %p107
        $region42: #{tpu_custom_call.1} parent=31 // pred_check_branch
          %288 = sbr.rel (%p286) target = $region44
        $region43: #{tpu_custom_call.1} parent=31 // pred_region
          %s290 = ssub.s32 64, 64
          %291 = vsyncadd %s282, %s290
          %s292 = smul.addr %s21, 64
          %s293 = scalar_lea.hbm %s3, %s292
          %s295 = sshll.u32 %s285, 4
          %s296 = int_to_ptr.vmem [resolvable:$true] %s295
          %298 = dma.vmem_to_hbm [thread:$0]  %s296, 64, %s293, %s282
        $region44: #{tpu_custom_call.1} parent=31 // pred_fallthru
          _
      $region32: #{tpu_custom_call.1} parent=5 // pred_fallthru
        _
      %p299 = scmp.le.s32.totalorder 2, %s16
      // Predicated region
      $region45: #{tpu_custom_call.1} parent=5 // pred_check
        %p300 = pneg %p299
      $region46: #{tpu_custom_call.1} parent=5 // pred_check_branch
        %302 = sbr.rel (%p300) target = $region48
      $region47: #{tpu_custom_call.1} parent=5 // pred_region
        %s303 = ssub.s32 %s16, 2
        // Predicated region
        $region49: #{tpu_custom_call.1} parent=47 // pred_check
          %p304 = pneg %p113
        $region50: #{tpu_custom_call.1} parent=47 // pred_check_branch
          %306 = sbr.rel (%p304) target = $region52
        $region51: #{tpu_custom_call.1} parent=47 // pred_region
          %s307 = sand.u32 %s98, 1
          %s308 = scalar_lea.sflag [#allocation4], %s307
          %s309 = sand.u32 %s98, 1
          %s310 = smul.addr %s309, 4
          %s311 = scalar_lea.vmem [#allocation7], %s310
          %312 = dma.done %s308, 64
        $region52: #{tpu_custom_call.1} parent=47 // pred_fallthru
          _
      $region48: #{tpu_custom_call.1} parent=5 // pred_fallthru
        _
    $region6: #{tpu_custom_call.1} parent=1 // loop_footer
      %s20 = sadd.s32 1, %s16
    $region7: #{tpu_custom_call.1} parent=1 // loop_footer_branch
      %15 = sbr.rel target = $region3
    $region8: #{tpu_custom_call.1} parent=1 // loop_exit
      _
    %313 = vsyncpa [#allocation3], 1
    %s314 = scalar_lea.sflag [#allocation3], 1
    %315 = vsyncpa %s314, 1
    %316 = vsyncpa [#allocation6], 1
    %317 = vsyncpa [#allocation4], 1
    %s318 = scalar_lea.sflag [#allocation4], 1
    %319 = vsyncpa %s318, 1

</llo_original>
